<compile_context>
chip_gen: v5e
topology: v5e:2x2
jax: 0.10.0
libtpu: 0.0.40
codegen_flags: <defaults>
</compile_context>

<pallas_src>
import math

import jax
import jax.numpy as jnp
from jax import lax
from jax.experimental import pallas as pl
from jax.experimental.pallas import tpu as pltpu


def _round_up(x, m):
    return (x + m - 1) // m * m


def _patch_embed_kernel(p_ref, w_ref, params_ref, o_ref):
    """Fused (im2col-patches @ W + b) -> LayerNorm(embed_dim) for one M tile.

    p_ref:      (TILE_M, K) bf16   im2col patch rows
    w_ref:      (K, E)      bf16   projection weight (resident across the grid)
    params_ref: (3, E)      f32    rows = [conv bias, LN gamma, LN beta]
    o_ref:      (TILE_M, E) out_dtype
    """
    y = jnp.dot(p_ref[...], w_ref[...], preferred_element_type=jnp.float32)
    y = y + params_ref[0:1, :]                         # conv bias (f32)

    # LayerNorm over the embedding dim (f32 stats). Variance from centered
    # values (the tile is already in registers, so this "second pass" is free
    # VPU work) -> no E[y^2]-E[y]^2 cancellation.
    mu = jnp.mean(y, axis=-1, keepdims=True)
    d = y - mu
    var = jnp.mean(d * d, axis=-1, keepdims=True)
    y_hat = d * lax.rsqrt(var + 1e-5)                  # eps = 1e-5 (PyTorch default)

    o_ref[...] = (y_hat * params_ref[1:2, :] + params_ref[2:3, :]).astype(o_ref.dtype)


def overlap_patch_embed(x, conv_w, conv_b, ln_w, ln_b, *, patch_size=7, stride=4,
                        out_dtype=jnp.bfloat16, tile_m=2048):
    """Forward pass of OverlapPatchEmbed.

    x:      (B, C_in, H, W)              float32, NCHW
    conv_w: (embed_dim, C_in, ph, pw)    PyTorch Conv2d weight layout
    conv_b: (embed_dim,)
    ln_w:   (embed_dim,)
    ln_b:   (embed_dim,)
    returns (B, H_out*W_out, embed_dim), H_out, W_out
    """
    B, C, H, W = x.shape
    E = conv_w.shape[0]
    ph = pw = patch_size
    pad = patch_size // 2
    H_out = (H + 2 * pad - ph) // stride + 1
    W_out = (W + 2 * pad - pw) // stride + 1

    # One fused extraction pass. Output features are ordered channel-major then
    # (kh, kw) row-major -- exactly matching conv_w.reshape(E, C*ph*pw).
    patches = lax.conv_general_dilated_patches(
        x, (ph, pw), (stride, stride),
        padding=((pad, pad), (pad, pad)),
        dimension_numbers=("NCHW", "OIHW", "NHWC"))          # (B, H_out, W_out, K)
    K = C * ph * pw
    M = B * H_out * W_out
    patches = patches.reshape(M, K).astype(jnp.bfloat16)      # K is minor: free reshape

    w_mat = conv_w.reshape(E, K).T.astype(jnp.bfloat16)       # (K, E)
    params = jnp.stack([conv_b, ln_w, ln_b]).astype(jnp.float32)   # (3, E)

    # Row tiling: 16-row alignment (bf16 sublane packing); keep >= 2 grid steps
    # when possible so both v7x TensorCores get work.
    TILE_M = min(tile_m, _round_up(M, 16))
    if pl.cdiv(M, TILE_M) < 2 and M >= 32:
        TILE_M = _round_up(pl.cdiv(M, 2), 16)
    grid_m = pl.cdiv(M, TILE_M)

    # VMEM budget from the real per-step working set (double-buffered streams +
    # resident weight/params), with 2x headroom, capped below physical VMEM.
    out_bytes = jnp.dtype(out_dtype).itemsize
    step_bytes = (2 * TILE_M * K * 2            # patch tile, bf16, double-buffered
                  + 2 * TILE_M * E * out_bytes  # output tile, double-buffered
                  + 2 * K * E * 2               # weight (resident)
                  + 2 * 3 * E * 4)              # packed params
    vmem_limit = int(min(max(32 * 1024 * 1024, 2 * step_bytes), 48 * 1024 * 1024))

    cost = pl.CostEstimate(
        flops=int(2 * M * K * E),
        transcendentals=int(M),
        bytes_accessed=int(M * K * 2 + K * E * 2 + 3 * E * 4 + M * E * out_bytes),
    )

    out_flat = pl.pallas_call(
        _patch_embed_kernel,
        out_shape=jax.ShapeDtypeStruct((M, E), out_dtype),
        grid=(grid_m,),
        in_specs=[
            pl.BlockSpec((TILE_M, K), lambda i: (i, 0)),   # patch tile (pipelined)
            pl.BlockSpec((K, E), lambda i: (0, 0)),        # projection weight (resident)
            pl.BlockSpec((3, E), lambda i: (0, 0)),        # [bias; gamma; beta]
        ],
        out_specs=pl.BlockSpec((TILE_M, E), lambda i: (i, 0)),
        compiler_params=pltpu.CompilerParams(
            dimension_semantics=("parallel",),
            vmem_limit_bytes=vmem_limit,
        ),
        cost_estimate=cost,
    )(patches, w_mat, params)

    out = out_flat.reshape(B, H_out * W_out, E)
    return out, H_out, W_out


def _reference(x, conv_w, conv_b, ln_w, ln_b, *, stride, pad):
    """Pure-JAX reference (conv + flatten/transpose + LayerNorm)."""
    y = lax.conv_general_dilated(
        x, conv_w, window_strides=(stride, stride),
        padding=((pad, pad), (pad, pad)),
        dimension_numbers=("NCHW", "OIHW", "NCHW"))
    y = y + conv_b[None, :, None, None]
    B, E, H, W = y.shape
    y = y.reshape(B, E, H * W).transpose(0, 2, 1)            # (B, N, E)
    mu = y.mean(-1, keepdims=True)
    var = ((y - mu) ** 2).mean(-1, keepdims=True)
    return (y - mu) / jnp.sqrt(var + 1e-5) * ln_w + ln_b, H, W


if __name__ == "__main__":
    # Small shapes consistent with the module: B=2, in_chans=4, 16x16 image,
    # patch_size=7, stride=4, embed_dim=32 -> H_out=W_out=4, 16 patches/image.
    B, C_in, HW = 2, 4, 16
    patch_size, stride, embed_dim = 7, 4, 32

    key = jax.random.PRNGKey(0)
    kx, kw = jax.random.split(key)

    x = jax.random.normal(kx, (B, C_in, HW, HW), dtype=jnp.float32)

    # Deterministic init mirroring the module's _init_weights:
    #   Conv2d: normal(0, sqrt(2 / fan_out)), fan_out = kh*kw*embed_dim; bias = 0
    #   LayerNorm: weight = 1, bias = 0
    fan_out = patch_size * patch_size * embed_dim
    conv_w = jax.random.normal(
        kw, (embed_dim, C_in, patch_size, patch_size), dtype=jnp.float32
    ) * math.sqrt(2.0 / fan_out)
    conv_b = jnp.zeros((embed_dim,), jnp.float32)
    ln_w = jnp.ones((embed_dim,), jnp.float32)
    ln_b = jnp.zeros((embed_dim,), jnp.float32)

    out, H_out, W_out = overlap_patch_embed(
        x, conv_w, conv_b, ln_w, ln_b, patch_size=patch_size, stride=stride
    )
    out = jax.block_until_ready(out)

    assert out.shape == (B, H_out * W_out, embed_dim), out.shape
    assert H_out == HW // stride and W_out == HW // stride

    ref, Hr, Wr = _reference(x, conv_w, conv_b, ln_w, ln_b,
                             stride=stride, pad=patch_size // 2)
    assert (Hr, Wr) == (H_out, W_out)
    # bf16 matmul operands + bf16 output, f32 accumulation/LN statistics.
    err = jnp.max(jnp.abs(out.astype(jnp.float32) - ref))
    assert jnp.allclose(out.astype(jnp.float32), ref, atol=5e-2, rtol=5e-2), float(err)

    print("KERNEL_OK")
</pallas_src>

<mosaic_0001>
module attributes {stable_mosaic.version = 11 : i64} {
  func.func @_patch_embed_kernel(%arg0: i32, %arg1: memref<16x196xbf16, #tpu.memory_space<vmem>>, %arg2: memref<196x32xbf16, #tpu.memory_space<vmem>>, %arg3: memref<3x32xf32, #tpu.memory_space<vmem>>, %arg4: memref<16x32xbf16, #tpu.memory_space<vmem>>) attributes {dimension_semantics = [#tpu.dimension_semantics<parallel>], iteration_bounds = array<i64: 2>, scalar_prefetch = 0 : i64, scratch_operands = 0 : i64, tpu.core_type = #tpu.core_type<tc>, window_params = [{transform_indices = @transform_0, window_bounds = array<i64: 16, 196>}, {pipeline_mode = #tpu.pipeline_mode<synchronous>, transform_indices = @transform_1, window_bounds = array<i64: 196, 32>}, {pipeline_mode = #tpu.pipeline_mode<synchronous>, transform_indices = @transform_2, window_bounds = array<i64: 3, 32>}, {transform_indices = @transform_3, window_bounds = array<i64: 16, 32>}]} {
    %c0 = arith.constant 0 : index
    %c0_0 = arith.constant 0 : index
    %0 = vector.load %arg1[%c0, %c0_0] : memref<16x196xbf16, #tpu.memory_space<vmem>>, vector<16x196xbf16>
    %c0_1 = arith.constant 0 : index
    %c0_2 = arith.constant 0 : index
    %1 = vector.load %arg2[%c0_1, %c0_2] : memref<196x32xbf16, #tpu.memory_space<vmem>>, vector<196x32xbf16>
    %cst = arith.constant dense<0.000000e+00> : vector<16x32xf32>
    %2 = tpu.matmul %0, %1, %cst {dimension_numbers = #tpu.dot_dimension_numbers<[1], [0], [0], [1], [0, 0, 1, 1], [], []>} : vector<16x196xbf16>, vector<196x32xbf16>, vector<16x32xf32> -> vector<16x32xf32>
    %c0_3 = arith.constant 0 : index
    %c0_4 = arith.constant 0 : index
    %3 = vector.load %arg3[%c0_3, %c0_4] : memref<3x32xf32, #tpu.memory_space<vmem>>, vector<1x32xf32>
    %4 = vector.broadcast %3 : vector<1x32xf32> to vector<16x32xf32>
    %5 = arith.addf %2, %4 : vector<16x32xf32>
    %cst_5 = arith.constant dense<0.000000e+00> : vector<16xf32>
    %6 = vector.multi_reduction <add>, %5, %cst_5 [1] : vector<16x32xf32> to vector<16xf32>
    %7 = vector.shape_cast %6 : vector<16xf32> to vector<16x1xf32>
    %cst_6 = arith.constant 3.200000e+01 : f32
    %8 = vector.broadcast %cst_6 : f32 to vector<16x1xf32>
    %9 = arith.divf %7, %8 : vector<16x1xf32>
    %10 = vector.broadcast %9 : vector<16x1xf32> to vector<16x32xf32>
    %11 = arith.subf %5, %10 : vector<16x32xf32>
    %12 = arith.mulf %11, %11 : vector<16x32xf32>
    %cst_7 = arith.constant dense<0.000000e+00> : vector<16xf32>
    %13 = vector.multi_reduction <add>, %12, %cst_7 [1] : vector<16x32xf32> to vector<16xf32>
    %14 = vector.shape_cast %13 : vector<16xf32> to vector<16x1xf32>
    %cst_8 = arith.constant 3.200000e+01 : f32
    %15 = vector.broadcast %cst_8 : f32 to vector<16x1xf32>
    %16 = arith.divf %14, %15 : vector<16x1xf32>
    %cst_9 = arith.constant 9.99999974E-6 : f32
    %17 = vector.broadcast %cst_9 : f32 to vector<16x1xf32>
    %18 = arith.addf %16, %17 : vector<16x1xf32>
    %19 = math.rsqrt %18 : vector<16x1xf32>
    %20 = vector.broadcast %19 : vector<16x1xf32> to vector<16x32xf32>
    %21 = arith.mulf %11, %20 : vector<16x32xf32>
    %c1 = arith.constant 1 : index
    %c0_10 = arith.constant 0 : index
    %22 = vector.load %arg3[%c1, %c0_10] : memref<3x32xf32, #tpu.memory_space<vmem>>, vector<1x32xf32>
    %23 = vector.broadcast %22 : vector<1x32xf32> to vector<16x32xf32>
    %24 = arith.mulf %21, %23 : vector<16x32xf32>
    %c2 = arith.constant 2 : index
    %c0_11 = arith.constant 0 : index
    %25 = vector.load %arg3[%c2, %c0_11] : memref<3x32xf32, #tpu.memory_space<vmem>>, vector<1x32xf32>
    %26 = vector.broadcast %25 : vector<1x32xf32> to vector<16x32xf32>
    %27 = arith.addf %24, %26 : vector<16x32xf32>
    %28 = arith.truncf %27 : vector<16x32xf32> to vector<16x32xbf16>
    %c0_12 = arith.constant 0 : index
    %c0_13 = arith.constant 0 : index
    %29 = vector.load %arg4[%c0_12, %c0_13] : memref<16x32xbf16, #tpu.memory_space<vmem>>, vector<16x32xbf16>
    tpu.vector_store %arg4[%c0_12, %c0_13], %28 {strides = array<i32>} : memref<16x32xbf16, #tpu.memory_space<vmem>>, vector<16x32xbf16>,
    return
  }
  func.func @transform_0(%arg0: i32) -> (i32, i32) {
    %c0_i32 = arith.constant 0 : i32
    %c0_i32_0 = arith.constant 0 : i32
    return %arg0, %c0_i32 : i32, i32
  }
  func.func @transform_1(%arg0: i32) -> (i32, i32) {
    %c0_i32 = arith.constant 0 : i32
    %c0_i32_0 = arith.constant 0 : i32
    %c0_i32_1 = arith.constant 0 : i32
    return %c0_i32, %c0_i32_0 : i32, i32
  }
  func.func @transform_2(%arg0: i32) -> (i32, i32) {
    %c0_i32 = arith.constant 0 : i32
    %c0_i32_0 = arith.constant 0 : i32
    %c0_i32_1 = arith.constant 0 : i32
    return %c0_i32, %c0_i32_0 : i32, i32
  }
  func.func @transform_3(%arg0: i32) -> (i32, i32) {
    %c0_i32 = arith.constant 0 : i32
    %c0_i32_0 = arith.constant 0 : i32
    return %arg0, %c0_i32 : i32, i32
  }
}

</mosaic_0001>

<llo_original>
// kernel: tpu_custom_call.1
$region0: #{tpu_custom_call.1}
  #allocation0 [shape = 'u32[]', space=smem, size = 0x4, offset = 0x4, fixed_abs, tag = 'smem constant byte address 0x4 - core index']
  #allocation1 [shape = 'u32[72,128]{1,0:T(1,128)}', space=vmem, size = 0x9000, scoped, tag = 'internal scratch']
  %s0 = inlined_call_operand.vmem [shape: bf16[32,196], index: 0, kind: input, shape index: {}]
  %s1 = inlined_call_operand.vmem [shape: bf16[196,32], index: 1, kind: input, shape index: {}]
  %s2 = inlined_call_operand.vmem [shape: f32[3,32], index: 2, kind: input, shape index: {}]
  %s3 = inlined_call_operand.hbm [shape: bf16[32,32], index: 3, kind: output, shape index: {}]
  %s4 = sld [smem:[#allocation0]]
  $region45: #{tpu_custom_call.1} parent=0
    _
  %s6 = ssub.s32 1, %s4
  %s7 = scalar_select 0, %s6, %s4
  $region1: #{tpu_custom_call.1} parent=0
    #allocation2 [shape = 'u8[8192]{0}', space=vmem, size = 0x2000, scoped, tag = 'output window, operand 0']
    #allocation3 [shape = 's32[2]{0}', space=sflag, size = 0x8, scoped, tag = 'scoped memory for tpu_custom_call.1']
    %8 = vsyncpa [#allocation3], 0
    %s9 = scalar_lea.sflag [#allocation3], 1
    %10 = vsyncpa %s9, 0
    loop: start=0, step=1, limit=4
    $region2: #{tpu_custom_call.1} parent=1 // loop_pre_header
      _
    $region3: #{tpu_custom_call.1} parent=1 // loop_header
      %s12 = sphi 0, %s16
      %p13 = scmp.ge.s32.totalorder %s12, 4
      %s22 = sphi 0, %s24
      %s25 = sphi 0, %s22
      %s26 = sphi 0, %s25
      %s42 = sphi 0, %s26
      %s46 = sphi 0, %s46
      %s48 = sphi 0, %s46
      %s49 = sphi 0, %s48
      %s63 = sphi 0, %s49
      %s67 = sphi 0, %s67
      %s69 = sphi 0, %s67
      %s70 = sphi 0, %s69
      %s84 = sphi 0, %s70
      %s90 = sphi 0, %s92
      %s93 = sphi 0, %s90
      %s94 = sphi 0, %s93
      %s110 = sphi 0, %s94
    $region4: #{tpu_custom_call.1} parent=1 // loop_header_branch
      %15 = sbr.rel (%p13) target = $region8
    $region5: #{tpu_custom_call.1} parent=1 // loop_body
      %s17 = ssub.s32 %s12, 1
      %s18 = ssub.s32 %s12, 2
      %s19 = sadd.s32 %s12, 1
      %s20 = ssub.s32 %s12, %s19
      %p21 = scmp.eq.s32.totalorder %s20, 0
      %s23 = sadd.s32 %s22, 1
      %s24 = scalar_select %p21, %s22, %s23
      %p27 = pneg %p21
      %p28 = scmp.eq.s32.totalorder %s12, 1
      %p29 = por %p27, %p28
      %p30 = scmp.ne.s32.totalorder %s22, %s25
      %p31 = scmp.eq.s32.totalorder %s12, 0
      %p32 = por %p30, %p31
      %p33 = scmp.ne.s32.totalorder %s22, %s25
      %p34 = scmp.eq.s32.totalorder %s17, 1
      %p35 = por %p33, %p34
      %p36 = scmp.ne.s32.totalorder %s25, %s26
      %p37 = scmp.eq.s32.totalorder %s17, 0
      %p38 = por %p36, %p37
      %p39 = scmp.ne.s32.totalorder %s25, %s26
      %p40 = scmp.eq.s32.totalorder %s18, 1
      %p41 = por %p39, %p40
      %p43 = scmp.ne.s32.totalorder %s26, %s42
      %p44 = scmp.eq.s32.totalorder %s18, 0
      %p45 = por %p43, %p44
      %s47 = sadd.s32 %s46, 1
      %p50 = scmp.eq.s32.totalorder %s12, 1
      %p51 = scmp.ne.s32.totalorder %s46, %s48
      %p52 = scmp.eq.s32.totalorder %s12, 0
      %p53 = por %p51, %p52
      %p54 = scmp.ne.s32.totalorder %s46, %s48
      %p55 = scmp.eq.s32.totalorder %s17, 1
      %p56 = por %p54, %p55
      %p57 = scmp.ne.s32.totalorder %s48, %s49
      %p58 = scmp.eq.s32.totalorder %s17, 0
      %p59 = por %p57, %p58
      %p60 = scmp.ne.s32.totalorder %s48, %s49
      %p61 = scmp.eq.s32.totalorder %s18, 1
      %p62 = por %p60, %p61
      %p64 = scmp.ne.s32.totalorder %s49, %s63
      %p65 = scmp.eq.s32.totalorder %s18, 0
      %p66 = por %p64, %p65
      %s68 = sadd.s32 %s67, 1
      %p71 = scmp.eq.s32.totalorder %s12, 1
      %p72 = scmp.ne.s32.totalorder %s67, %s69
      %p73 = scmp.eq.s32.totalorder %s12, 0
      %p74 = por %p72, %p73
      %p75 = scmp.ne.s32.totalorder %s67, %s69
      %p76 = scmp.eq.s32.totalorder %s17, 1
      %p77 = por %p75, %p76
      %p78 = scmp.ne.s32.totalorder %s69, %s70
      %p79 = scmp.eq.s32.totalorder %s17, 0
      %p80 = por %p78, %p79
      %p81 = scmp.ne.s32.totalorder %s69, %s70
      %p82 = scmp.eq.s32.totalorder %s18, 1
      %p83 = por %p81, %p82
      %p85 = scmp.ne.s32.totalorder %s70, %s84
      %p86 = scmp.eq.s32.totalorder %s18, 0
      %p87 = por %p85, %p86
      %s88 = ssub.s32 %s12, %s19
      %p89 = scmp.eq.s32.totalorder %s88, 0
      %s91 = sadd.s32 %s90, 1
      %s92 = scalar_select %p89, %s90, %s91
      %p95 = pneg %p89
      %p96 = scmp.eq.s32.totalorder %s12, 1
      %p97 = por %p95, %p96
      %p98 = scmp.ne.s32.totalorder %s90, %s93
      %p99 = scmp.eq.s32.totalorder %s12, 0
      %p100 = por %p98, %p99
      %p101 = scmp.ne.s32.totalorder %s90, %s93
      %p102 = scmp.eq.s32.totalorder %s17, 1
      %p103 = por %p101, %p102
      %p104 = scmp.ne.s32.totalorder %s93, %s94
      %p105 = scmp.eq.s32.totalorder %s17, 0
      %p106 = por %p104, %p105
      %p107 = scmp.ne.s32.totalorder %s93, %s94
      %p108 = scmp.eq.s32.totalorder %s18, 1
      %p109 = por %p107, %p108
      %p111 = scmp.ne.s32.totalorder %s94, %s110
      %p112 = scmp.eq.s32.totalorder %s18, 0
      %p113 = por %p111, %p112
      %p114 = scmp.le.s32.totalorder 1, %s12
      %p115 = scmp.lt.s32.totalorder %s12, 3
      %p116 = pnand %p114, %p115
      %p117 = pneg %p116
      // Predicated region
      $region9: #{tpu_custom_call.1} parent=5 // pred_check
        _
      $region10: #{tpu_custom_call.1} parent=5 // pred_check_branch
        %119 = sbr.rel (%p116) target = $region12
      $region11: #{tpu_custom_call.1} parent=5 // pred_region
        %s120 = ssub.s32 %s12, 1
        // Predicated region
        $region13: #{tpu_custom_call.1} parent=11 // pred_check
          %p121 = pneg %p59
        $region14: #{tpu_custom_call.1} parent=11 // pred_check_branch
          %123 = sbr.rel (%p121) target = $region16
        $region15: #{tpu_custom_call.1} parent=11 // pred_region
          _
        $region16: #{tpu_custom_call.1} parent=11 // pred_fallthru
          _
        // Predicated region
        $region17: #{tpu_custom_call.1} parent=11 // pred_check
          %p124 = pneg %p80
        $region18: #{tpu_custom_call.1} parent=11 // pred_check_branch
          %126 = sbr.rel (%p124) target = $region20
        $region19: #{tpu_custom_call.1} parent=11 // pred_region
          _
        $region20: #{tpu_custom_call.1} parent=11 // pred_fallthru
          _
      $region12: #{tpu_custom_call.1} parent=5 // pred_fallthru
        _
      %p127 = scmp.lt.s32.totalorder %s12, 2
      // Predicated region
      $region21: #{tpu_custom_call.1} parent=5 // pred_check
        %p128 = pneg %p127
      $region22: #{tpu_custom_call.1} parent=5 // pred_check_branch
        %130 = sbr.rel (%p128) target = $region24
      $region23: #{tpu_custom_call.1} parent=5 // pred_region
        // Predicated region
        $region25: #{tpu_custom_call.1} parent=23 // pred_check
          %p131 = pneg %p32
        $region26: #{tpu_custom_call.1} parent=23 // pred_check_branch
          %133 = sbr.rel (%p131) target = $region28
        $region27: #{tpu_custom_call.1} parent=23 // pred_region
          %s134 = smul.u32 2, %s12
          %p135 = scmp.lt.s32.totalorder %s134, 3
          %s136 = scalar_select %p135, %s134, 3
          %s137 = smul.addr %s136, 2
          %s138 = smul.addr %s137, 4
          %s139 = scalar_lea.vmem %s0, %s138
          %s140 = smul.u32 2, %s12
        $region28: #{tpu_custom_call.1} parent=23 // pred_fallthru
          _
      $region24: #{tpu_custom_call.1} parent=5 // pred_fallthru
        _
      %p141 = scmp.le.s32.totalorder 1, %s12
      %p142 = scmp.lt.s32.totalorder %s12, 3
      %p143 = pnand %p141, %p142
      %p144 = pneg %p143
      // Predicated region
      $region29: #{tpu_custom_call.1} parent=5 // pred_check
        _
      $region30: #{tpu_custom_call.1} parent=5 // pred_check_branch
        %146 = sbr.rel (%p143) target = $region32
      $region31: #{tpu_custom_call.1} parent=5 // pred_region
        %s147 = ssub.s32 %s12, 1
        %s148 = smul.u32 2, %s17
        %p149 = scmp.lt.s32.totalorder %s148, 3
        %s150 = scalar_select %p149, %s148, 3
        %s151 = smul.addr %s150, 2
        %s152 = smul.addr %s151, 4
        %s153 = scalar_lea.vmem %s0, %s152
        %p154 = pneg %p38
        %p155 = pneg %p35
        %p156 = pneg %p59
        %p157 = pneg %p56
        %p158 = pneg %p80
        %p159 = pneg %p77
        %p160 = pneg %p106
        %p161 = pneg %p103
        %s162 = sand.u32 %s93, 1
        %s163 = scalar_lea.sflag [#allocation3], %s162
        %s164 = sand.u32 %s93, 1
        %s165 = smul.addr %s164, 8
        %s166 = scalar_lea.vmem [#allocation2], %s165
        %s167 = smul.u32 2, %s17
        %p168 = scmp.lt.s32.totalorder %s167, 3
        %s169 = scalar_select %p168, %s167, 3
        %s170 = smul.addr %s169, 2
        %s171 = smul.addr %s170, 4
        %s172 = scalar_lea.vmem %s0, %s171
        %s173 = smul.u32 2, %s17
        %s174 = smul.u32 2, %s17
        %v176 = vld [vmem:[%s172] sm:$0xff]
        %v177 = vld [vmem:[%s172 + $0x8] sm:$0xff]
        %v178 = vld [vmem:[%s1] sm:$0xf]
        %v179 = vld [vmem:[%s1 + $0x4] sm:$0xf]
        %v180 = vld [vmem:[%s1 + $0x8] sm:$0xf]
        %v181 = vld [vmem:[%s1 + $0xc] sm:$0xf]
        %v182 = vld [vmem:[%s1 + $0x10] sm:$0xf]
        %v183 = vld [vmem:[%s1 + $0x14] sm:$0xf]
        %v184 = vld [vmem:[%s1 + $0x18] sm:$0xf]
        %v185 = vld [vmem:[%s1 + $0x1c] sm:$0xf]
        %v186 = vld [vmem:[%s1 + $0x20] sm:$0xf]
        %v187 = vld [vmem:[%s1 + $0x24] sm:$0xf]
        %v188 = vld [vmem:[%s1 + $0x28] sm:$0xf]
        %v189 = vld [vmem:[%s1 + $0x2c] sm:$0xf]
        %v190 = vld [vmem:[%s1 + $0x30] sm:$0xf]
        %v191 = vld [vmem:[%s1 + $0x34] sm:$0xf]
        %v192 = vld [vmem:[%s1 + $0x38] sm:$0xf]
        %v193 = vld [vmem:[%s1 + $0x3c] sm:$0xf]
        %v194 = vld [vmem:[%s1 + $0x40] sm:$0xf]
        %v195 = vld [vmem:[%s1 + $0x44] sm:$0xf]
        %v196 = vld [vmem:[%s1 + $0x48] sm:$0xf]
        %v197 = vld [vmem:[%s1 + $0x4c] sm:$0xf]
        %v198 = vld [vmem:[%s1 + $0x50] sm:$0xf]
        %v199 = vld [vmem:[%s1 + $0x54] sm:$0xf]
        %v200 = vld [vmem:[%s1 + $0x58] sm:$0xf]
        %v201 = vld [vmem:[%s1 + $0x5c] sm:$0xf]
        %v202 = vld [vmem:[%s1 + $0x60] sm:$0x3]
        %v203 = vld [vmem:[%s2] sm:$0x1]
        %v204 = vperm.slane %v203, 0
        %v207 = vunpack.c.l.b16 %v176
        %v208 = vunpack.c.h.b16 %v176
        %v209 = vunpack.c.l.b16 %v177
        %v210 = vunpack.c.h.b16 %v177
        %v211 = vpack.c.b16 %v209, %v207
        %v212 = vpack.c.b16 %v210, %v208
        %v239 = vunpack.c.l.b16 %v178
        %v240 = vunpack.c.l.b16 %v179
        %v241 = vunpack.c.l.b16 %v180
        %v242 = vunpack.c.l.b16 %v181
        %v243 = vunpack.c.l.b16 %v182
        %v244 = vunpack.c.l.b16 %v183
        %v245 = vunpack.c.l.b16 %v184
        %v246 = vunpack.c.l.b16 %v185
        %v247 = vunpack.c.l.b16 %v186
        %v248 = vunpack.c.l.b16 %v187
        %v249 = vunpack.c.l.b16 %v188
        %v250 = vunpack.c.l.b16 %v189
        %v251 = vunpack.c.l.b16 %v190
        %v252 = vunpack.c.l.b16 %v191
        %v253 = vunpack.c.l.b16 %v192
        %v254 = vunpack.c.l.b16 %v193
        %v255 = vunpack.c.l.b16 %v194
        %v256 = vunpack.c.l.b16 %v195
        %v257 = vunpack.c.l.b16 %v196
        %v258 = vunpack.c.l.b16 %v197
        %v259 = vunpack.c.l.b16 %v198
        %v260 = vunpack.c.l.b16 %v199
        %v261 = vunpack.c.l.b16 %v200
        %v262 = vunpack.c.l.b16 %v201
        %v263 = vunpack.c.l.b16 %v202
        %v264 = vpack.c.b16 %v240, %v239
        %v265 = vpack.c.b16 %v242, %v241
        %v266 = vpack.c.b16 %v244, %v243
        %v267 = vpack.c.b16 %v246, %v245
        %v268 = vpack.c.b16 %v248, %v247
        %v269 = vpack.c.b16 %v250, %v249
        %v270 = vpack.c.b16 %v252, %v251
        %v271 = vpack.c.b16 %v254, %v253
        %v272 = vpack.c.b16 %v256, %v255
        %v273 = vpack.c.b16 %v258, %v257
        %v274 = vpack.c.b16 %v260, %v259
        %v275 = vpack.c.b16 %v262, %v261
        %v276 = vpack.c.b16 %v263, %v263
        %vm289 = vcmask 556032
        %v291 = vsel %vm289, %v212, 0
        %vm293 = vcmask 1041408
        %v295 = vsel %vm293, %v276, 0
        %297 = vmatpush.bf16.msra.mxu0 %v271
        %298 = vmatpush.bf16.msra.mxu0 %v270
        %299 = vmatpush.bf16.msra.mxu0 %v269
        %300 = vmatpush.bf16.msra.mxu0 %v268
        %301 = vmatpush.bf16.msra.mxu0 %v267
        %302 = vmatpush.bf16.msra.mxu0 %v266
        %303 = vmatpush.bf16.msra.mxu0 %v265
        %304 = vmatpush.bf16.msra.mxu0 %v264
        %305 = vmatmul.bf16.gmra.mxu0 %v211
        %v306 = vpop.f32.mrf.mxu0
        %v307 = vadd.f32 %v204, %v306
        %v308 = vpop.f32.mrf.mxu0
        %v309 = vadd.f32 %v204, %v308
        %310 = vdwg.mxu0
        %311 = vmatpush.bf16.msra.mxu0 0
        %312 = vmatpush.bf16.msra.mxu0 0
        %313 = vmatpush.bf16.msra.mxu0 0
        %314 = vmatpush.bf16.msra.mxu0 %v295
        %315 = vmatpush.bf16.msra.mxu0 %v275
        %316 = vmatpush.bf16.msra.mxu0 %v274
        %317 = vmatpush.bf16.msra.mxu0 %v273
        %318 = vmatpush.bf16.msra.mxu0 %v272
        %319 = vmatmul.bf16.gmra.mxu0 %v291
        %v320 = vpop.f32.mrf.mxu0
        %v321 = vadd.f32 %v307, %v320
        %v322 = vpop.f32.mrf.mxu0
        %v323 = vadd.f32 %v309, %v322
        %324 = vdwg.mxu0
        %vm325 = vcmask 261120
        %v326 = vsel %vm325, %v321, 0.0
        %327 = vadd.xlane.f32.xlu0 %v326
        %v328 = vpop.xlane.xlu0 %327
        %v329 = vsel %vm325, %v323, 0.0
        %330 = vadd.xlane.f32.xlu0 %v329
        %v331 = vpop.xlane.xlu0 %330
        %v332 = vrcp.pop 32.0
        %v333 = vmul.f32 32.0, %v332
        %v334 = vsub.f32 1.0, %v333
        %v335 = vmul.f32 %v332, %v334
        %v336 = vadd.f32 %v332, %v335
        %vm337 = vweird.f32 %v332
        %v338 = vsel %vm337, %v332, %v336
        %v339 = vmul.f32 %v328, %v338
        %v340 = vmul.f32 %v331, %v338
        %v341 = vsub.f32 %v321, %v339
        %v342 = vsub.f32 %v323, %v340
        %v343 = vmul.f32 %v341, %v341
        %v344 = vmul.f32 %v342, %v342
        %v345 = vsel %vm325, %v343, 0.0
        %346 = vadd.xlane.f32.xlu0 %v345
        %v347 = vpop.xlane.xlu0 %346
        %v348 = vsel %vm325, %v344, 0.0
        %349 = vadd.xlane.f32.xlu0 %v348
        %v350 = vpop.xlane.xlu0 %349
        %v351 = vmul.f32 %v347, %v338
        %v352 = vmul.f32 %v350, %v338
        %v353 = vadd.f32 %v351, 1e-05
        %v354 = vadd.f32 %v352, 1e-05
        %v355 = vrsqrt.pop %v353
        %v356 = vmul.f32 %v355, %v353
        %v357 = vmul.f32 %v356, %v355
        %v358 = vmul.f32 0.5, %v357
        %v359 = vsub.f32 1.5, %v358
        %v360 = vmul.f32 %v355, %v359
        %vm361 = vweird.f32 %v353
        %vm362 = vweird.f32 %v355
        %vm363 = vmor %vm361, %vm362
        %v364 = vsel %vm363, %v355, %v360
        %v365 = vrsqrt.pop %v354
        %v366 = vmul.f32 %v365, %v354
        %v367 = vmul.f32 %v366, %v365
        %v368 = vmul.f32 0.5, %v367
        %v369 = vsub.f32 1.5, %v368
        %v370 = vmul.f32 %v365, %v369
        %vm371 = vweird.f32 %v354
        %vm372 = vweird.f32 %v365
        %vm373 = vmor %vm371, %vm372
        %v374 = vsel %vm373, %v365, %v370
        %v375 = vmul.f32 %v341, %v364
        %v376 = vmul.f32 %v342, %v374
        %v377 = vld [vmem:[%s2 + $0x1] sm:$0x1]
        %v378 = vperm.slane %v377, 0
        %v379 = vmul.f32 %v375, %v378
        %v380 = vmul.f32 %v376, %v378
        %v381 = vld [vmem:[%s2 + $0x2] sm:$0x1]
        %v382 = vperm.slane %v381, 0
        %v383 = vadd.f32 %v379, %v382
        %v384 = vadd.f32 %v380, %v382
        %v385 = vpack.c.bf16 %v383, %v383
        %v386 = vpack.c.bf16 %v384, %v384
        %vm387 = vcmask 257024
        %388 = vst.msk [vmem:[%s166] sm:$0xf] %vm387, %v385
        %389 = vst.msk [vmem:[%s166 + $0x4] sm:$0xf] %vm387, %v386
        %s390 = sand.u32 %s93, 1
        %s391 = scalar_lea.sflag [#allocation3], %s390
        %s392 = sand.u32 %s93, 1
        %s393 = smul.addr %s392, 8
        %s394 = scalar_lea.vmem [#allocation2], %s393
        // Predicated region
        $region33: #{tpu_custom_call.1} parent=31 // pred_check
          %p395 = pneg %p103
        $region34: #{tpu_custom_call.1} parent=31 // pred_check_branch
          %397 = sbr.rel (%p395) target = $region36
        $region35: #{tpu_custom_call.1} parent=31 // pred_region
          %s398 = smul.u32 2, %s17
          %400 = vsyncadd %s391, 0
          %s401 = smul.addr %s398, 4
          %s402 = scalar_lea.hbm %s3, %s401
          %s403 = sshll.u32 %s394, 4
          %s404 = int_to_ptr.vmem [resolvable:$true] %s403
          %s405 = sshll.u32 %s402, 4
          %s406 = int_to_ptr.hbm [resolvable:$true] %s405
          %411 = dma.vmem_to_hbm [thread:$0]  %s404, 128, %s406, %s391, 64, 64, 4
        $region36: #{tpu_custom_call.1} parent=31 // pred_fallthru
          _
      $region32: #{tpu_custom_call.1} parent=5 // pred_fallthru
        _
      %p412 = scmp.le.s32.totalorder 2, %s12
      // Predicated region
      $region37: #{tpu_custom_call.1} parent=5 // pred_check
        %p413 = pneg %p412
      $region38: #{tpu_custom_call.1} parent=5 // pred_check_branch
        %415 = sbr.rel (%p413) target = $region40
      $region39: #{tpu_custom_call.1} parent=5 // pred_region
        %s416 = ssub.s32 %s12, 2
        // Predicated region
        $region41: #{tpu_custom_call.1} parent=39 // pred_check
          %p417 = pneg %p109
        $region42: #{tpu_custom_call.1} parent=39 // pred_check_branch
          %419 = sbr.rel (%p417) target = $region44
        $region43: #{tpu_custom_call.1} parent=39 // pred_region
          %s420 = sand.u32 %s94, 1
          %s421 = scalar_lea.sflag [#allocation3], %s420
          %s422 = sand.u32 %s94, 1
          %s423 = smul.addr %s422, 8
          %s424 = scalar_lea.vmem [#allocation2], %s423
          %426 = dma.done %s421, 128
        $region44: #{tpu_custom_call.1} parent=39 // pred_fallthru
          _
      $region40: #{tpu_custom_call.1} parent=5 // pred_fallthru
        _
    $region6: #{tpu_custom_call.1} parent=1 // loop_footer
      %s16 = sadd.s32 1, %s12
    $region7: #{tpu_custom_call.1} parent=1 // loop_footer_branch
      %11 = sbr.rel target = $region3
    $region8: #{tpu_custom_call.1} parent=1 // loop_exit
      _
    %427 = vsyncpa [#allocation3], 1
    %s428 = scalar_lea.sflag [#allocation3], 1
    %429 = vsyncpa %s428, 1

</llo_original>
